<compile_context>
chip_gen: v7x
topology: tpu7x:2x2x1
jax: 0.10.0
libtpu: 0.0.40
codegen_flags: <defaults>
</compile_context>

<pallas_src>
import functools

import jax
import jax.numpy as jnp
from jax import lax
from jax.experimental import pallas as pl
from jax.experimental.pallas import tpu as pltpu


def _round_up(x, m):
    return ((x + m - 1) // m) * m


def _cov_tile_kernel(xr_ref, xc_ref, out_ref, *, inv_dm1):
    """Compute one (tm, tn) tile of the covariance matrix.

    xr_ref: (tile, d) centered embedding rows (output-row block), VMEM
    xc_ref: (tile, d) centered embedding rows (output-col block), VMEM
    out_ref: (tile, tile) float32, VMEM

    Contraction is over the last (lane) dim of BOTH operands, so the MXU consumes the
    NT form natively - no transpose of xc is materialized.  The 1/(d-1) scale rides the
    VPU slot and is hidden under the MXU / store path.
    """
    acc = lax.dot_general(
        xr_ref[...],
        xc_ref[...],
        dimension_numbers=(((1,), (1,)), ((), ())),
        preferred_element_type=jnp.float32,
    )
    out_ref[...] = (acc * inv_dm1).astype(out_ref.dtype)


def covariance_model_forward(embedding_weight, *, tile=512, use_bf16_operands=False):
    """JAX wrapper mirroring CovarianceModel.forward().

    embedding(range(n)) is exactly the full embedding table, so the weight matrix is passed
    straight in (no gather needed).

    tile:               output tile edge (forced to a multiple of 128, clipped to the padded
                        problem size).
    use_bf16_operands:  cast the centered operands to bf16 (f32 accumulation) for ~2x MXU
                        throughput / half the operand bytes on v6e/v7x.  Loosens achievable
                        tolerance to ~1e-2 relative.
    """
    n, d = embedding_weight.shape
    if d < 2:
        raise ValueError("latent_dim must be >= 2 for the (d - 1) covariance normalizer")

    # ---- centering hoisted out of the per-tile body: runs once over n*d elements
    #      instead of once per column block inside the kernel.
    x = embedding_weight.astype(jnp.float32)
    xm = x - jnp.mean(x, axis=1, keepdims=True)

    op_dtype = jnp.bfloat16 if use_bf16_operands else jnp.float32
    xm_op = xm.astype(op_dtype)

    # ---- padding:
    #  * output padded only to the next multiple of 128 (lane-dense vst, minimal extra
    #    HBM output bytes); ragged edge blocks get masked stores.
    #  * input zero-padded to whole tiles (cheap, n*d) so every block read is in-bounds
    #    and no unspecified data can reach in-bounds outputs.
    n_out = _round_up(n, 128)
    tile = max(128, (int(tile) // 128) * 128)
    tile = min(tile, n_out)
    grid_n = pl.cdiv(n_out, tile)
    n_in = grid_n * tile
    if n_in != n:
        xm_op = jnp.pad(xm_op, ((0, n_in - n), (0, 0)))

    kernel = functools.partial(_cov_tile_kernel, inv_dm1=1.0 / (d - 1))

    op_bytes = jnp.dtype(op_dtype).itemsize
    cost = pl.CostEstimate(
        flops=2 * n_in * n_in * d,
        transcendentals=0,
        bytes_accessed=n_out * n_out * 4 + 2 * grid_n * n_in * d * op_bytes,
    )

    cov_padded = pl.pallas_call(
        kernel,
        out_shape=jax.ShapeDtypeStruct((n_out, n_out), jnp.float32),
        grid=(grid_n, grid_n),
        in_specs=[
            pl.BlockSpec((tile, d), lambda i, j: (i, 0),
                         memory_space=pltpu.MemorySpace.VMEM),
            pl.BlockSpec((tile, d), lambda i, j: (j, 0),
                         memory_space=pltpu.MemorySpace.VMEM),
        ],
        out_specs=pl.BlockSpec((tile, tile), lambda i, j: (i, j),
                               memory_space=pltpu.MemorySpace.VMEM),
        compiler_params=pltpu.CompilerParams(
            dimension_semantics=("parallel", "parallel"),
        ),
        cost_estimate=cost,
    )(xm_op, xm_op)

    return cov_padded[:n, :n]


def covariance_reference(embedding_weight):
    """Pure-JAX reference for correctness checking (and the faster path for tiny n)."""
    x = embedding_weight.astype(jnp.float32)
    mean = jnp.mean(x, axis=1, keepdims=True)
    xm = x - mean
    return xm @ xm.T / (x.shape[1] - 1)


if __name__ == "__main__":
    latent_dim = 32  # matches CovarianceModel.__init__
    key = jax.random.PRNGKey(0)

    # Case 1: the module's own size (n=16). Single padded (128, 128) tile, grid (1, 1).
    n_small = 16
    w_small = jax.random.normal(key, (n_small, latent_dim), dtype=jnp.float32)
    cov_small = jax.block_until_ready(covariance_model_forward(w_small))
    ref_small = covariance_reference(w_small)
    assert cov_small.shape == (n_small, n_small)
    assert jnp.allclose(cov_small, ref_small, atol=1e-5, rtol=1e-5), (
        "Pallas kernel mismatch vs reference (small)")

    # Case 2: ragged 2-D grid path: n=300 -> output padded to 384, tile=256, grid (2, 2),
    # edge blocks use masked stores.
    n_mid = 300
    w_mid = jax.random.normal(jax.random.PRNGKey(0), (n_mid, latent_dim), dtype=jnp.float32)
    cov_mid = jax.block_until_ready(covariance_model_forward(w_mid, tile=256))
    ref_mid = covariance_reference(w_mid)
    assert cov_mid.shape == (n_mid, n_mid)
    assert jnp.allclose(cov_mid, ref_mid, atol=1e-4, rtol=1e-4), (
        "Pallas kernel mismatch vs reference (ragged grid)")

    # Case 3: default tile=512 with a non-tile-multiple n: output padded to 640 only
    # (previously this would have padded all the way to 1024).
    n_big = 600
    w_big = jax.random.normal(jax.random.PRNGKey(1), (n_big, latent_dim), dtype=jnp.float32)
    cov_big = jax.block_until_ready(covariance_model_forward(w_big))
    ref_big = covariance_reference(w_big)
    assert cov_big.shape == (n_big, n_big)
    assert jnp.allclose(cov_big, ref_big, atol=1e-4, rtol=1e-4), (
        "Pallas kernel mismatch vs reference (default tile, ragged edges)")

    print("KERNEL_OK")
</pallas_src>

<mosaic_0001>
module attributes {stable_mosaic.version = 11 : i64} {
  func.func @_cov_tile_kernel(%arg0: i32, %arg1: i32, %arg2: memref<128x32xf32, #tpu.memory_space<vmem>>, %arg3: memref<128x32xf32, #tpu.memory_space<vmem>>, %arg4: memref<128x128xf32, #tpu.memory_space<vmem>>) attributes {dimension_semantics = [#tpu.dimension_semantics<parallel>, #tpu.dimension_semantics<parallel>], iteration_bounds = array<i64: 1, 1>, scalar_prefetch = 0 : i64, scratch_operands = 0 : i64, tpu.core_type = #tpu.core_type<tc>, window_params = [{transform_indices = @transform_0, window_bounds = array<i64: 128, 32>}, {transform_indices = @transform_1, window_bounds = array<i64: 128, 32>}, {transform_indices = @transform_2, window_bounds = array<i64: 128, 128>}]} {
    %c0 = arith.constant 0 : index
    %c0_0 = arith.constant 0 : index
    %0 = vector.load %arg2[%c0, %c0_0] : memref<128x32xf32, #tpu.memory_space<vmem>>, vector<128x32xf32>
    %c0_1 = arith.constant 0 : index
    %c0_2 = arith.constant 0 : index
    %1 = vector.load %arg3[%c0_1, %c0_2] : memref<128x32xf32, #tpu.memory_space<vmem>>, vector<128x32xf32>
    %cst = arith.constant dense<0.000000e+00> : vector<128x128xf32>
    %2 = tpu.matmul %0, %1, %cst {dimension_numbers = #tpu.dot_dimension_numbers<[1], [1], [0], [0], [0, 0, 1, 0], [], []>} : vector<128x32xf32>, vector<128x32xf32>, vector<128x128xf32> -> vector<128x128xf32>
    %cst_3 = arith.constant 0.0322580636 : f32
    %3 = vector.broadcast %cst_3 : f32 to vector<128x128xf32>
    %4 = arith.mulf %2, %3 : vector<128x128xf32>
    %c0_4 = arith.constant 0 : index
    %c0_5 = arith.constant 0 : index
    %5 = vector.load %arg4[%c0_4, %c0_5] : memref<128x128xf32, #tpu.memory_space<vmem>>, vector<128x128xf32>
    tpu.vector_store %arg4[%c0_4, %c0_5], %4 {strides = array<i32>} : memref<128x128xf32, #tpu.memory_space<vmem>>, vector<128x128xf32>,
    return
  }
  func.func @transform_0(%arg0: i32, %arg1: i32) -> (i32, i32) {
    %c0_i32 = arith.constant 0 : i32
    %c0_i32_0 = arith.constant 0 : i32
    return %arg0, %c0_i32 : i32, i32
  }
  func.func @transform_1(%arg0: i32, %arg1: i32) -> (i32, i32) {
    %c0_i32 = arith.constant 0 : i32
    %c0_i32_0 = arith.constant 0 : i32
    return %arg1, %c0_i32 : i32, i32
  }
  func.func @transform_2(%arg0: i32, %arg1: i32) -> (i32, i32) {
    %c0_i32 = arith.constant 0 : i32
    return %arg0, %arg1 : i32, i32
  }
}

</mosaic_0001>

<llo_original>
// kernel: tpu_custom_call.1
$region0: #{tpu_custom_call.1}
  #allocation0 [shape = 'u32[]', space=smem, size = 0x4, offset = 0x4, fixed_abs, tag = 'smem constant byte address 0x4 - core index']
  #allocation1 [shape = 'u32[144,128]{1,0:T(1,128)}', space=vmem, size = 0x12000, scoped, tag = 'internal scratch']
  %s0 = inlined_call_operand.vmem [shape: f32[128,32], index: 0, kind: input, shape index: {}]
  %s1 = inlined_call_operand.vmem [shape: f32[128,32], index: 1, kind: input, shape index: {}]
  %s2 = inlined_call_operand.hbm [shape: f32[128,128], index: 2, kind: output, shape index: {}]
  %s3 = sld [smem:[#allocation0]]
  $region18: #{tpu_custom_call.1} parent=0
    _
  %s5 = ssub.s32 1, %s3
  %s6 = scalar_select 0, %s5, %s3
  $region1: #{tpu_custom_call.1} parent=0
    #allocation2 [shape = 'u8[65536]{0}', space=vmem, size = 0x10000, scoped, tag = 'output window, operand 0, single buffered']
    #allocation3 [shape = 's32[1]{0}', space=sflag, size = 0x4, scoped, tag = 'scoped memory for tpu_custom_call.1']
    %7 = vsyncpa [#allocation3], 0
    // Predicated region
    $region2: #{tpu_custom_call.1} parent=1 // pred_check
      _
    $region3: #{tpu_custom_call.1} parent=1 // pred_check_branch
      %9 = sbr.rel (0) target = $region5
    $region4: #{tpu_custom_call.1} parent=1 // pred_region
      _
    $region5: #{tpu_custom_call.1} parent=1 // pred_fallthru
      _
    // Predicated region
    $region6: #{tpu_custom_call.1} parent=1 // pred_check
      _
    $region7: #{tpu_custom_call.1} parent=1 // pred_check_branch
      %11 = sbr.rel (0) target = $region9
    $region8: #{tpu_custom_call.1} parent=1 // pred_region
      _
    $region9: #{tpu_custom_call.1} parent=1 // pred_fallthru
      _
    %v12 = vld [vmem:[%s0] sm:$0xff]
    %v13 = vld [vmem:[%s0 + $0x8] sm:$0xff]
    %v14 = vld [vmem:[%s0 + $0x10] sm:$0xff]
    %v15 = vld [vmem:[%s0 + $0x18] sm:$0xff]
    %v16 = vld [vmem:[%s0 + $0x20] sm:$0xff]
    %v17 = vld [vmem:[%s0 + $0x28] sm:$0xff]
    %v18 = vld [vmem:[%s0 + $0x30] sm:$0xff]
    %v19 = vld [vmem:[%s0 + $0x38] sm:$0xff]
    %v20 = vld [vmem:[%s0 + $0x40] sm:$0xff]
    %v21 = vld [vmem:[%s0 + $0x48] sm:$0xff]
    %v22 = vld [vmem:[%s0 + $0x50] sm:$0xff]
    %v23 = vld [vmem:[%s0 + $0x58] sm:$0xff]
    %v24 = vld [vmem:[%s0 + $0x60] sm:$0xff]
    %v25 = vld [vmem:[%s0 + $0x68] sm:$0xff]
    %v26 = vld [vmem:[%s0 + $0x70] sm:$0xff]
    %v27 = vld [vmem:[%s0 + $0x78] sm:$0xff]
    %v28 = vld [vmem:[%s1] sm:$0xff]
    %v29 = vld [vmem:[%s1 + $0x8] sm:$0xff]
    %v30 = vld [vmem:[%s1 + $0x10] sm:$0xff]
    %v31 = vld [vmem:[%s1 + $0x18] sm:$0xff]
    %v32 = vld [vmem:[%s1 + $0x20] sm:$0xff]
    %v33 = vld [vmem:[%s1 + $0x28] sm:$0xff]
    %v34 = vld [vmem:[%s1 + $0x30] sm:$0xff]
    %v35 = vld [vmem:[%s1 + $0x38] sm:$0xff]
    %v36 = vld [vmem:[%s1 + $0x40] sm:$0xff]
    %v37 = vld [vmem:[%s1 + $0x48] sm:$0xff]
    %v38 = vld [vmem:[%s1 + $0x50] sm:$0xff]
    %v39 = vld [vmem:[%s1 + $0x58] sm:$0xff]
    %v40 = vld [vmem:[%s1 + $0x60] sm:$0xff]
    %v41 = vld [vmem:[%s1 + $0x68] sm:$0xff]
    %v42 = vld [vmem:[%s1 + $0x70] sm:$0xff]
    %v43 = vld [vmem:[%s1 + $0x78] sm:$0xff]
    %vm44 = vcmask 261120
    %v46 = vsel %vm44, %v12, 0
    %v49 = vsel %vm44, %v13, 0
    %v52 = vsel %vm44, %v14, 0
    %v55 = vsel %vm44, %v15, 0
    %v58 = vsel %vm44, %v16, 0
    %v61 = vsel %vm44, %v17, 0
    %v64 = vsel %vm44, %v18, 0
    %v67 = vsel %vm44, %v19, 0
    %v70 = vsel %vm44, %v20, 0
    %v73 = vsel %vm44, %v21, 0
    %v76 = vsel %vm44, %v22, 0
    %v79 = vsel %vm44, %v23, 0
    %v82 = vsel %vm44, %v24, 0
    %v85 = vsel %vm44, %v25, 0
    %v88 = vsel %vm44, %v26, 0
    %v91 = vsel %vm44, %v27, 0
    %v94 = vsel %vm44, %v28, 0
    %v97 = vsel %vm44, %v29, 0
    %v100 = vsel %vm44, %v30, 0
    %v103 = vsel %vm44, %v31, 0
    %v106 = vsel %vm44, %v32, 0
    %v109 = vsel %vm44, %v33, 0
    %v112 = vsel %vm44, %v34, 0
    %v115 = vsel %vm44, %v35, 0
    %v118 = vsel %vm44, %v36, 0
    %v121 = vsel %vm44, %v37, 0
    %v124 = vsel %vm44, %v38, 0
    %v127 = vsel %vm44, %v39, 0
    %v130 = vsel %vm44, %v40, 0
    %v133 = vsel %vm44, %v41, 0
    %v136 = vsel %vm44, %v42, 0
    %v139 = vsel %vm44, %v43, 0
    %141 = vmatprep.subr.mxu0 0.0
    %142 = vmatpush1.xpose.msra.mxu0 %v94
    %143 = vmatprep.subr.mxu0 0.0
    %144 = vmatpush1.xpose.msra.mxu0 %v97
    %145 = vmatprep.subr.mxu0 0.0
    %146 = vmatpush1.xpose.msra.mxu0 %v100
    %147 = vmatprep.subr.mxu0 0.0
    %148 = vmatpush1.xpose.msra.mxu0 %v103
    %149 = vmatprep.subr.mxu0 0.0
    %150 = vmatpush1.xpose.msra.mxu0 %v106
    %151 = vmatprep.subr.mxu0 0.0
    %152 = vmatpush1.xpose.msra.mxu0 %v109
    %153 = vmatprep.subr.mxu0 0.0
    %154 = vmatpush1.xpose.msra.mxu0 %v112
    %155 = vmatprep.subr.mxu0 0.0
    %156 = vmatpush1.xpose.msra.mxu0 %v115
    %157 = vmatprep.subr.mxu0 0.0
    %158 = vmatpush1.xpose.msra.mxu0 %v118
    %159 = vmatprep.subr.mxu0 0.0
    %160 = vmatpush1.xpose.msra.mxu0 %v121
    %161 = vmatprep.subr.mxu0 0.0
    %162 = vmatpush1.xpose.msra.mxu0 %v124
    %163 = vmatprep.subr.mxu0 0.0
    %164 = vmatpush1.xpose.msra.mxu0 %v127
    %165 = vmatprep.subr.mxu0 0.0
    %166 = vmatpush1.xpose.msra.mxu0 %v130
    %167 = vmatprep.subr.mxu0 0.0
    %168 = vmatpush1.xpose.msra.mxu0 %v133
    %169 = vmatprep.subr.mxu0 0.0
    %170 = vmatpush1.xpose.msra.mxu0 %v136
    %171 = vmatprep.subr.mxu0 0.0
    %172 = vmatpush1.xpose.msra.mxu0 %v139
    %173 = vmatprep.subr.mxu0 0.0
    %174 = vmatpush1.xpose.msra.mxu0 0.0
    %175 = vmatprep.subr.mxu0 0.0
    %176 = vmatpush1.xpose.msra.mxu0 0.0
    %177 = vmatprep.subr.mxu0 0.0
    %178 = vmatpush1.xpose.msra.mxu0 0.0
    %179 = vmatprep.subr.mxu0 0.0
    %180 = vmatpush1.xpose.msra.mxu0 0.0
    %181 = vmatprep.subr.mxu0 0.0
    %182 = vmatpush1.xpose.msra.mxu0 0.0
    %183 = vmatprep.subr.mxu0 0.0
    %184 = vmatpush1.xpose.msra.mxu0 0.0
    %185 = vmatprep.subr.mxu0 0.0
    %186 = vmatpush1.xpose.msra.mxu0 0.0
    %187 = vmatprep.subr.mxu0 0.0
    %188 = vmatpush1.xpose.msra.mxu0 0.0
    %189 = vmatprep.subr.mxu0 0.0
    %190 = vmatpush1.xpose.msra.mxu0 0.0
    %191 = vmatprep.subr.mxu0 0.0
    %192 = vmatpush1.xpose.msra.mxu0 0.0
    %193 = vmatprep.subr.mxu0 0.0
    %194 = vmatpush1.xpose.msra.mxu0 0.0
    %195 = vmatprep.subr.mxu0 0.0
    %196 = vmatpush1.xpose.msra.mxu0 0.0
    %197 = vmatprep.subr.mxu0 0.0
    %198 = vmatpush1.xpose.msra.mxu0 0.0
    %199 = vmatprep.subr.mxu0 0.0
    %200 = vmatpush1.xpose.msra.mxu0 0.0
    %201 = vmatprep.subr.mxu0 0.0
    %202 = vmatpush1.xpose.msra.mxu0 0.0
    %203 = vmatprep.subr.mxu0 0.0
    %204 = vmatpush1.xpose.msra.mxu0 0.0
    %205 = vmatprep.mubr.f32.mxu0 0.0
    %206 = vmatmul.mubr.f32.gmra.mrb[0].mxu0 %v46
    %v207 = vpop.f32.mrb[0].mxu0
    %v208 = vadd.f32 0.0, %v207
    %v209 = vpop.f32.mrb[0].mxu0
    %210 = vmatprep.mubr.f32.mxu0 0.0
    %211 = vmatmul.mubr.f32.gmra.mrb[0].mxu0 %v49
    %v212 = vpop.f32.mrb[0].mxu0
    %v213 = vadd.f32 0.0, %v212
    %v214 = vpop.f32.mrb[0].mxu0
    %215 = vmatprep.mubr.f32.mxu0 0.0
    %216 = vmatmul.mubr.f32.gmra.mrb[0].mxu0 %v52
    %v217 = vpop.f32.mrb[0].mxu0
    %v218 = vadd.f32 0.0, %v217
    %v219 = vpop.f32.mrb[0].mxu0
    %220 = vmatprep.mubr.f32.mxu0 0.0
    %221 = vmatmul.mubr.f32.gmra.mrb[0].mxu0 %v55
    %v222 = vpop.f32.mrb[0].mxu0
    %v223 = vadd.f32 0.0, %v222
    %v224 = vpop.f32.mrb[0].mxu0
    %225 = vmatprep.mubr.f32.mxu0 0.0
    %226 = vmatmul.mubr.f32.gmra.mrb[0].mxu0 %v58
    %v227 = vpop.f32.mrb[0].mxu0
    %v228 = vadd.f32 0.0, %v227
    %v229 = vpop.f32.mrb[0].mxu0
    %230 = vmatprep.mubr.f32.mxu0 0.0
    %231 = vmatmul.mubr.f32.gmra.mrb[0].mxu0 %v61
    %v232 = vpop.f32.mrb[0].mxu0
    %v233 = vadd.f32 0.0, %v232
    %v234 = vpop.f32.mrb[0].mxu0
    %235 = vmatprep.mubr.f32.mxu0 0.0
    %236 = vmatmul.mubr.f32.gmra.mrb[0].mxu0 %v64
    %v237 = vpop.f32.mrb[0].mxu0
    %v238 = vadd.f32 0.0, %v237
    %v239 = vpop.f32.mrb[0].mxu0
    %240 = vmatprep.mubr.f32.mxu0 0.0
    %241 = vmatmul.mubr.f32.gmra.mrb[0].mxu0 %v67
    %v242 = vpop.f32.mrb[0].mxu0
    %v243 = vadd.f32 0.0, %v242
    %v244 = vpop.f32.mrb[0].mxu0
    %245 = vmatprep.mubr.f32.mxu0 0.0
    %246 = vmatmul.mubr.f32.gmra.mrb[0].mxu0 %v70
    %v247 = vpop.f32.mrb[0].mxu0
    %v248 = vadd.f32 0.0, %v247
    %v249 = vpop.f32.mrb[0].mxu0
    %250 = vmatprep.mubr.f32.mxu0 0.0
    %251 = vmatmul.mubr.f32.gmra.mrb[0].mxu0 %v73
    %v252 = vpop.f32.mrb[0].mxu0
    %v253 = vadd.f32 0.0, %v252
    %v254 = vpop.f32.mrb[0].mxu0
    %255 = vmatprep.mubr.f32.mxu0 0.0
    %256 = vmatmul.mubr.f32.gmra.mrb[0].mxu0 %v76
    %v257 = vpop.f32.mrb[0].mxu0
    %v258 = vadd.f32 0.0, %v257
    %v259 = vpop.f32.mrb[0].mxu0
    %260 = vmatprep.mubr.f32.mxu0 0.0
    %261 = vmatmul.mubr.f32.gmra.mrb[0].mxu0 %v79
    %v262 = vpop.f32.mrb[0].mxu0
    %v263 = vadd.f32 0.0, %v262
    %v264 = vpop.f32.mrb[0].mxu0
    %265 = vmatprep.mubr.f32.mxu0 0.0
    %266 = vmatmul.mubr.f32.gmra.mrb[0].mxu0 %v82
    %v267 = vpop.f32.mrb[0].mxu0
    %v268 = vadd.f32 0.0, %v267
    %v269 = vpop.f32.mrb[0].mxu0
    %270 = vmatprep.mubr.f32.mxu0 0.0
    %271 = vmatmul.mubr.f32.gmra.mrb[0].mxu0 %v85
    %v272 = vpop.f32.mrb[0].mxu0
    %v273 = vadd.f32 0.0, %v272
    %v274 = vpop.f32.mrb[0].mxu0
    %275 = vmatprep.mubr.f32.mxu0 0.0
    %276 = vmatmul.mubr.f32.gmra.mrb[0].mxu0 %v88
    %v277 = vpop.f32.mrb[0].mxu0
    %v278 = vadd.f32 0.0, %v277
    %v279 = vpop.f32.mrb[0].mxu0
    %280 = vmatprep.mubr.f32.mxu0 0.0
    %281 = vmatmul.mubr.f32.gmra.mrb[0].mxu0 %v91
    %v282 = vpop.f32.mrb[0].mxu0
    %v283 = vadd.f32 0.0, %v282
    %v284 = vpop.f32.mrb[0].mxu0
    %285 = vdwg.mxu0
    %v286 = vmul.f32 %v208, 0.032258064
    %v287 = vmul.f32 %v213, 0.032258064
    %v288 = vmul.f32 %v218, 0.032258064
    %v289 = vmul.f32 %v223, 0.032258064
    %v290 = vmul.f32 %v228, 0.032258064
    %v291 = vmul.f32 %v233, 0.032258064
    %v292 = vmul.f32 %v238, 0.032258064
    %v293 = vmul.f32 %v243, 0.032258064
    %v294 = vmul.f32 %v248, 0.032258064
    %v295 = vmul.f32 %v253, 0.032258064
    %v296 = vmul.f32 %v258, 0.032258064
    %v297 = vmul.f32 %v263, 0.032258064
    %v298 = vmul.f32 %v268, 0.032258064
    %v299 = vmul.f32 %v273, 0.032258064
    %v300 = vmul.f32 %v278, 0.032258064
    %v301 = vmul.f32 %v283, 0.032258064
    %302 = vst [vmem:[#allocation2] sm:$0xff] %v286
    %303 = vst [vmem:[#allocation2 + $0x8] sm:$0xff] %v287
    %304 = vst [vmem:[#allocation2 + $0x10] sm:$0xff] %v288
    %305 = vst [vmem:[#allocation2 + $0x18] sm:$0xff] %v289
    %306 = vst [vmem:[#allocation2 + $0x20] sm:$0xff] %v290
    %307 = vst [vmem:[#allocation2 + $0x28] sm:$0xff] %v291
    %308 = vst [vmem:[#allocation2 + $0x30] sm:$0xff] %v292
    %309 = vst [vmem:[#allocation2 + $0x38] sm:$0xff] %v293
    %310 = vst [vmem:[#allocation2 + $0x40] sm:$0xff] %v294
    %311 = vst [vmem:[#allocation2 + $0x48] sm:$0xff] %v295
    %312 = vst [vmem:[#allocation2 + $0x50] sm:$0xff] %v296
    %313 = vst [vmem:[#allocation2 + $0x58] sm:$0xff] %v297
    %314 = vst [vmem:[#allocation2 + $0x60] sm:$0xff] %v298
    %315 = vst [vmem:[#allocation2 + $0x68] sm:$0xff] %v299
    %316 = vst [vmem:[#allocation2 + $0x70] sm:$0xff] %v300
    %317 = vst [vmem:[#allocation2 + $0x78] sm:$0xff] %v301
    // Predicated region
    $region10: #{tpu_custom_call.1} parent=1 // pred_check
      _
    $region11: #{tpu_custom_call.1} parent=1 // pred_check_branch
      %319 = sbr.rel (0) target = $region13
    $region12: #{tpu_custom_call.1} parent=1 // pred_region
      %s321 = ssub.s32 2048, 2048
      %322 = vsyncadd [#allocation3], %s321
      %s323 = sshll.u32 [#allocation2], 4
      %s324 = int_to_ptr.vmem [resolvable:$true] %s323
      %329 = dma.vmem_to_hbm [thread:$0]  %s324, 2048, %s2, [#allocation3], 128, 128, 8
    $region13: #{tpu_custom_call.1} parent=1 // pred_fallthru
      _
    // Predicated region
    $region14: #{tpu_custom_call.1} parent=1 // pred_check
      _
    $region15: #{tpu_custom_call.1} parent=1 // pred_check_branch
      %331 = sbr.rel (0) target = $region17
    $region16: #{tpu_custom_call.1} parent=1 // pred_region
      %332 = dma.done [#allocation3], 2048
    $region17: #{tpu_custom_call.1} parent=1 // pred_fallthru
      _
    %333 = vsyncpa [#allocation3], 1

</llo_original>
